<compile_context>
chip_gen: v7x
topology: tpu7x:2x2x1
jax: 0.10.0
libtpu: 0.0.40
codegen_flags: <defaults>
</compile_context>

<pallas_src>
import jax
import jax.numpy as jnp
from jax.experimental import pallas as pl
from jax.experimental.pallas import tpu as pltpu

_LANE = 128
_SUB = 8
_MAX_BLOCK_ROWS = 1024   # (1024,128) f32 = 512 KiB per block per input


def _cdiv(a, b):
    return -(-a // b)


def _round_up(x, m):
    return ((x + m - 1) // m) * m


def _make_kernel(rows, block_rows, blocks_per_shard, need_mask):
    def kernel(old_ref, new_ref, orig_ref, xy_ref, xx_ref, yy_ref):
        b = pl.program_id(1)

        @pl.when(b == 0)
        def _init():
            xy_ref[...] = jnp.zeros_like(xy_ref)
            xx_ref[...] = jnp.zeros_like(xx_ref)
            yy_ref[...] = jnp.zeros_like(yy_ref)

        orig = orig_ref[...].astype(jnp.float32)
        x = old_ref[...].astype(jnp.float32) - orig
        y = new_ref[...].astype(jnp.float32) - orig

        if need_mask:
            s = pl.program_id(0)
            row_start = (s * blocks_per_shard + b) * block_rows
            row_ids = row_start + jax.lax.broadcasted_iota(
                jnp.int32, (block_rows, _LANE), 0)
            valid = row_ids < rows
            x = jnp.where(valid, x, 0.0)
            y = jnp.where(valid, y, 0.0)

        def _partial(p):
            # (block_rows, 128) -> (8, 128) partial sum: pure VPU vreg adds.
            return p.reshape(block_rows // _SUB, _SUB, _LANE).sum(axis=0)

        xy_ref[...] += _partial(x * y).reshape(1, _SUB, _LANE)
        xx_ref[...] += _partial(x * x).reshape(1, _SUB, _LANE)
        yy_ref[...] += _partial(y * y).reshape(1, _SUB, _LANE)

    return kernel


def _prep(a, padded_len):
    f = a.reshape(-1)                      # free reshape, native dtype kept
    if padded_len != f.shape[0]:
        f = jnp.pad(f, (0, padded_len - f.shape[0]))
    return f.reshape(-1, _LANE)


def mid_layer_target_loss(old_attack_mid, new_mid, original_mid, coeff,
                          max_block_rows=_MAX_BLOCK_ROWS):
    assert old_attack_mid.shape == new_mid.shape == original_mid.shape
    n = old_attack_mid.size
    # pad only when ragged; guarantee at least 8 rows of 128 lanes
    padded_len = max(_round_up(n, _LANE), _SUB * _LANE)
    rows = padded_len // _LANE

    old2d = _prep(old_attack_mid, padded_len)
    new2d = _prep(new_mid, padded_len)
    org2d = _prep(original_mid, padded_len)

    block_rows = min(max_block_rows, (rows // _SUB) * _SUB)   # multiple of 8, <= rows
    total_blocks = _cdiv(rows, block_rows)
    num_shards = 2 if total_blocks >= 2 else 1   # 2 TensorCores on v7x; no-op elsewhere
    bps = _cdiv(total_blocks, num_shards)        # blocks per shard
    need_mask = (num_shards * bps * block_rows) != rows

    if num_shards * bps == total_blocks:
        def in_map(s, b):
            return (s * bps + b, 0)
    else:
        # clamp duplicated trailing blocks; their rows are masked to zero in-kernel
        def in_map(s, b):
            return (jnp.minimum(s * bps + b, total_blocks - 1), 0)

    in_spec = pl.BlockSpec((block_rows, _LANE), in_map)
    out_spec = pl.BlockSpec((1, _SUB, _LANE), lambda s, b: (s, 0, 0))
    out_sds = jax.ShapeDtypeStruct((num_shards, _SUB, _LANE), jnp.float32)

    kernel = _make_kernel(rows, block_rows, bps, need_mask)

    xy_p, xx_p, yy_p = pl.pallas_call(
        kernel,
        out_shape=(out_sds, out_sds, out_sds),
        grid_spec=pltpu.PrefetchScalarGridSpec(
            num_scalar_prefetch=0,
            grid=(num_shards, bps),
            in_specs=[in_spec, in_spec, in_spec],
            out_specs=[out_spec, out_spec, out_spec],
        ),
        compiler_params=pltpu.CompilerParams(
            dimension_semantics=("parallel", "arbitrary")),
    )(old2d, new2d, org2d)

    # Tiny scalar epilogue (norms / division / coeff) in plain JAX.
    sxy = jnp.sum(xy_p)
    sxx = jnp.sum(xx_p)
    syy = jnp.sum(yy_p)
    x_norm = jnp.sqrt(sxx)
    y_norm = jnp.sqrt(syy)
    y_zero = syy == 0.0
    # torch: if y == 0 everywhere, y_norm = y -> angle = 0, gain = 0
    angle = jnp.where(y_zero, 0.0, sxy / (x_norm * y_norm))
    gain = jnp.where(y_zero, 0.0, y_norm / x_norm)
    coeff = jnp.asarray(coeff, jnp.float32)
    return (angle + gain * coeff).reshape(1, 1)


def _reference(old_attack_mid, new_mid, original_mid, coeff):
    x = (old_attack_mid - original_mid).reshape(1, -1).astype(jnp.float32)
    y = (new_mid - original_mid).reshape(1, -1).astype(jnp.float32)
    xn = jnp.linalg.norm(x)
    yn = jnp.linalg.norm(y)
    x_norm = x / xn
    y_norm = jnp.where(yn == 0.0, y, y / jnp.where(yn == 0.0, 1.0, yn))
    angle = x_norm @ y_norm.T
    gain = yn / xn
    return angle + gain * jnp.float32(coeff)


if __name__ == "__main__":
    key = jax.random.PRNGKey(0)
    k1, k2, k3 = jax.random.split(key, 3)

    # mid-layer activations, NCHW: batch=2, channels=4, spatial=16x16
    shape = (2, 4, 16, 16)
    old_attack_mid = jax.random.normal(k1, shape, dtype=jnp.float32)
    new_mid = jax.random.normal(k2, shape, dtype=jnp.float32)
    original_mid = jax.random.normal(k3, shape, dtype=jnp.float32)
    coeff = 0.5

    out = jax.block_until_ready(
        mid_layer_target_loss(old_attack_mid, new_mid, original_mid, coeff))
    ref = _reference(old_attack_mid, new_mid, original_mid, coeff)
    assert out.shape == (1, 1)
    assert jnp.allclose(out, ref, rtol=1e-5, atol=1e-5), (out, ref)

    # degenerate case: new_mid == original_mid  ->  y == 0 branch
    out0 = jax.block_until_ready(
        mid_layer_target_loss(old_attack_mid, original_mid, original_mid, coeff))
    assert jnp.allclose(out0, jnp.zeros((1, 1), jnp.float32), atol=1e-6)

    # ragged row count (1152 elems -> 9 rows): masked boundary block + 2 shards
    shape2 = (2, 4, 12, 12)
    a2 = jax.random.normal(k1, shape2, dtype=jnp.float32)
    b2 = jax.random.normal(k2, shape2, dtype=jnp.float32)
    c2 = jax.random.normal(k3, shape2, dtype=jnp.float32)
    out2 = jax.block_until_ready(mid_layer_target_loss(a2, b2, c2, 1.25))
    ref2 = _reference(a2, b2, c2, 1.25)
    assert jnp.allclose(out2, ref2, rtol=1e-5, atol=1e-5), (out2, ref2)

    # bf16 inputs, multi-block per shard with clamped index_map (40 rows, block 16)
    shape3 = (2, 4, 16, 40)
    a3 = jax.random.normal(k1, shape3, dtype=jnp.float32).astype(jnp.bfloat16)
    b3 = jax.random.normal(k2, shape3, dtype=jnp.float32).astype(jnp.bfloat16)
    c3 = jax.random.normal(k3, shape3, dtype=jnp.float32).astype(jnp.bfloat16)
    out3 = jax.block_until_ready(
        mid_layer_target_loss(a3, b3, c3, 0.75, max_block_rows=16))
    ref3 = _reference(a3.astype(jnp.float32), b3.astype(jnp.float32),
                      c3.astype(jnp.float32), 0.75)
    assert jnp.allclose(out3, ref3, rtol=2e-2, atol=2e-2), (out3, ref3)

    print("KERNEL_OK")
</pallas_src>

<mosaic_0001>
module attributes {stable_mosaic.version = 11 : i64} {
  func.func @kernel(%arg0: i32, %arg1: i32, %arg2: memref<16x128xf32, #tpu.memory_space<vmem>>, %arg3: memref<16x128xf32, #tpu.memory_space<vmem>>, %arg4: memref<16x128xf32, #tpu.memory_space<vmem>>, %arg5: memref<1x8x128xf32, #tpu.memory_space<vmem>>, %arg6: memref<1x8x128xf32, #tpu.memory_space<vmem>>, %arg7: memref<1x8x128xf32, #tpu.memory_space<vmem>>) attributes {dimension_semantics = [#tpu.dimension_semantics<parallel>, #tpu.dimension_semantics<arbitrary>], iteration_bounds = array<i64: 1, 1>, scalar_prefetch = 0 : i64, scratch_operands = 0 : i64, tpu.core_type = #tpu.core_type<tc>, window_params = [{transform_indices = @transform_0, window_bounds = array<i64: 16, 128>}, {transform_indices = @transform_1, window_bounds = array<i64: 16, 128>}, {transform_indices = @transform_2, window_bounds = array<i64: 16, 128>}, {transform_indices = @transform_3, window_bounds = array<i64: 1, 8, 128>}, {transform_indices = @transform_4, window_bounds = array<i64: 1, 8, 128>}, {transform_indices = @transform_5, window_bounds = array<i64: 1, 8, 128>}]} {
    %c0_i32 = arith.constant 0 : i32
    %0 = arith.cmpi eq, %arg1, %c0_i32 : i32
    %1 = arith.extui %0 : i1 to i32
    %c0_i32_0 = arith.constant 0 : i32
    %2 = arith.cmpi ne, %1, %c0_i32_0 : i32
    scf.if %2 {
      %cst_26 = arith.constant 0.000000e+00 : f32
      %29 = vector.broadcast %cst_26 : f32 to vector<1x8x128xf32>
      %c0_27 = arith.constant 0 : index
      %c0_28 = arith.constant 0 : index
      %c0_29 = arith.constant 0 : index
      %30 = vector.load %arg5[%c0_27, %c0_28, %c0_29] : memref<1x8x128xf32, #tpu.memory_space<vmem>>, vector<1x8x128xf32>
      tpu.vector_store %arg5[%c0_27, %c0_28, %c0_29], %29 {strides = array<i32>} : memref<1x8x128xf32, #tpu.memory_space<vmem>>, vector<1x8x128xf32>,
      %cst_30 = arith.constant 0.000000e+00 : f32
      %31 = vector.broadcast %cst_30 : f32 to vector<1x8x128xf32>
      %c0_31 = arith.constant 0 : index
      %c0_32 = arith.constant 0 : index
      %c0_33 = arith.constant 0 : index
      %32 = vector.load %arg6[%c0_31, %c0_32, %c0_33] : memref<1x8x128xf32, #tpu.memory_space<vmem>>, vector<1x8x128xf32>
      tpu.vector_store %arg6[%c0_31, %c0_32, %c0_33], %31 {strides = array<i32>} : memref<1x8x128xf32, #tpu.memory_space<vmem>>, vector<1x8x128xf32>,
      %cst_34 = arith.constant 0.000000e+00 : f32
      %33 = vector.broadcast %cst_34 : f32 to vector<1x8x128xf32>
      %c0_35 = arith.constant 0 : index
      %c0_36 = arith.constant 0 : index
      %c0_37 = arith.constant 0 : index
      %34 = vector.load %arg7[%c0_35, %c0_36, %c0_37] : memref<1x8x128xf32, #tpu.memory_space<vmem>>, vector<1x8x128xf32>
      tpu.vector_store %arg7[%c0_35, %c0_36, %c0_37], %33 {strides = array<i32>} : memref<1x8x128xf32, #tpu.memory_space<vmem>>, vector<1x8x128xf32>,
    } else {
    }
    %c0 = arith.constant 0 : index
    %c0_1 = arith.constant 0 : index
    %3 = vector.load %arg4[%c0, %c0_1] : memref<16x128xf32, #tpu.memory_space<vmem>>, vector<16x128xf32>
    %c0_2 = arith.constant 0 : index
    %c0_3 = arith.constant 0 : index
    %4 = vector.load %arg2[%c0_2, %c0_3] : memref<16x128xf32, #tpu.memory_space<vmem>>, vector<16x128xf32>
    %5 = arith.subf %4, %3 : vector<16x128xf32>
    %c0_4 = arith.constant 0 : index
    %c0_5 = arith.constant 0 : index
    %6 = vector.load %arg3[%c0_4, %c0_5] : memref<16x128xf32, #tpu.memory_space<vmem>>, vector<16x128xf32>
    %7 = arith.subf %6, %3 : vector<16x128xf32>
    %c0_6 = arith.constant 0 : index
    %c0_7 = arith.constant 0 : index
    %c0_8 = arith.constant 0 : index
    %8 = vector.load %arg5[%c0_6, %c0_7, %c0_8] : memref<1x8x128xf32, #tpu.memory_space<vmem>>, vector<1x8x128xf32>
    %9 = arith.mulf %5, %7 : vector<16x128xf32>
    %10 = vector.shape_cast %9 : vector<16x128xf32> to vector<2x8x128xf32>
    %cst = arith.constant dense<0.000000e+00> : vector<8x128xf32>
    %11 = vector.multi_reduction <add>, %10, %cst [0] : vector<2x8x128xf32> to vector<8x128xf32>
    %12 = vector.shape_cast %11 : vector<8x128xf32> to vector<1x8x128xf32>
    %13 = arith.addf %8, %12 : vector<1x8x128xf32>
    %c0_9 = arith.constant 0 : index
    %c0_10 = arith.constant 0 : index
    %c0_11 = arith.constant 0 : index
    %14 = vector.load %arg5[%c0_9, %c0_10, %c0_11] : memref<1x8x128xf32, #tpu.memory_space<vmem>>, vector<1x8x128xf32>
    tpu.vector_store %arg5[%c0_9, %c0_10, %c0_11], %13 {strides = array<i32>} : memref<1x8x128xf32, #tpu.memory_space<vmem>>, vector<1x8x128xf32>,
    %c0_12 = arith.constant 0 : index
    %c0_13 = arith.constant 0 : index
    %c0_14 = arith.constant 0 : index
    %15 = vector.load %arg6[%c0_12, %c0_13, %c0_14] : memref<1x8x128xf32, #tpu.memory_space<vmem>>, vector<1x8x128xf32>
    %16 = arith.mulf %5, %5 : vector<16x128xf32>
    %17 = vector.shape_cast %16 : vector<16x128xf32> to vector<2x8x128xf32>
    %cst_15 = arith.constant dense<0.000000e+00> : vector<8x128xf32>
    %18 = vector.multi_reduction <add>, %17, %cst_15 [0] : vector<2x8x128xf32> to vector<8x128xf32>
    %19 = vector.shape_cast %18 : vector<8x128xf32> to vector<1x8x128xf32>
    %20 = arith.addf %15, %19 : vector<1x8x128xf32>
    %c0_16 = arith.constant 0 : index
    %c0_17 = arith.constant 0 : index
    %c0_18 = arith.constant 0 : index
    %21 = vector.load %arg6[%c0_16, %c0_17, %c0_18] : memref<1x8x128xf32, #tpu.memory_space<vmem>>, vector<1x8x128xf32>
    tpu.vector_store %arg6[%c0_16, %c0_17, %c0_18], %20 {strides = array<i32>} : memref<1x8x128xf32, #tpu.memory_space<vmem>>, vector<1x8x128xf32>,
    %c0_19 = arith.constant 0 : index
    %c0_20 = arith.constant 0 : index
    %c0_21 = arith.constant 0 : index
    %22 = vector.load %arg7[%c0_19, %c0_20, %c0_21] : memref<1x8x128xf32, #tpu.memory_space<vmem>>, vector<1x8x128xf32>
    %23 = arith.mulf %7, %7 : vector<16x128xf32>
    %24 = vector.shape_cast %23 : vector<16x128xf32> to vector<2x8x128xf32>
    %cst_22 = arith.constant dense<0.000000e+00> : vector<8x128xf32>
    %25 = vector.multi_reduction <add>, %24, %cst_22 [0] : vector<2x8x128xf32> to vector<8x128xf32>
    %26 = vector.shape_cast %25 : vector<8x128xf32> to vector<1x8x128xf32>
    %27 = arith.addf %22, %26 : vector<1x8x128xf32>
    %c0_23 = arith.constant 0 : index
    %c0_24 = arith.constant 0 : index
    %c0_25 = arith.constant 0 : index
    %28 = vector.load %arg7[%c0_23, %c0_24, %c0_25] : memref<1x8x128xf32, #tpu.memory_space<vmem>>, vector<1x8x128xf32>
    tpu.vector_store %arg7[%c0_23, %c0_24, %c0_25], %27 {strides = array<i32>} : memref<1x8x128xf32, #tpu.memory_space<vmem>>, vector<1x8x128xf32>,
    return
  }
  func.func @transform_0(%arg0: i32, %arg1: i32) -> (i32, i32) {
    %c1_i32 = arith.constant 1 : i32
    %0 = arith.muli %arg0, %c1_i32 : i32
    %1 = arith.addi %0, %arg1 : i32
    %c0_i32 = arith.constant 0 : i32
    %c0_i32_0 = arith.constant 0 : i32
    return %1, %c0_i32 : i32, i32
  }
  func.func @transform_1(%arg0: i32, %arg1: i32) -> (i32, i32) {
    %c1_i32 = arith.constant 1 : i32
    %0 = arith.muli %arg0, %c1_i32 : i32
    %1 = arith.addi %0, %arg1 : i32
    %c0_i32 = arith.constant 0 : i32
    %c0_i32_0 = arith.constant 0 : i32
    return %1, %c0_i32 : i32, i32
  }
  func.func @transform_2(%arg0: i32, %arg1: i32) -> (i32, i32) {
    %c1_i32 = arith.constant 1 : i32
    %0 = arith.muli %arg0, %c1_i32 : i32
    %1 = arith.addi %0, %arg1 : i32
    %c0_i32 = arith.constant 0 : i32
    %c0_i32_0 = arith.constant 0 : i32
    return %1, %c0_i32 : i32, i32
  }
  func.func @transform_3(%arg0: i32, %arg1: i32) -> (i32, i32, i32) {
    %c0_i32 = arith.constant 0 : i32
    %c0_i32_0 = arith.constant 0 : i32
    %c0_i32_1 = arith.constant 0 : i32
    return %arg0, %c0_i32, %c0_i32_0 : i32, i32, i32
  }
  func.func @transform_4(%arg0: i32, %arg1: i32) -> (i32, i32, i32) {
    %c0_i32 = arith.constant 0 : i32
    %c0_i32_0 = arith.constant 0 : i32
    %c0_i32_1 = arith.constant 0 : i32
    return %arg0, %c0_i32, %c0_i32_0 : i32, i32, i32
  }
  func.func @transform_5(%arg0: i32, %arg1: i32) -> (i32, i32, i32) {
    %c0_i32 = arith.constant 0 : i32
    %c0_i32_0 = arith.constant 0 : i32
    %c0_i32_1 = arith.constant 0 : i32
    return %arg0, %c0_i32, %c0_i32_0 : i32, i32, i32
  }
}

</mosaic_0001>

<llo_original>
// kernel: tpu_custom_call.1
$region0: #{tpu_custom_call.1}
  #allocation0 [shape = 'u32[]', space=smem, size = 0x4, offset = 0x4, fixed_abs, tag = 'smem constant byte address 0x4 - core index']
  #allocation1 [shape = 'u32[144,128]{1,0:T(1,128)}', space=vmem, size = 0x12000, scoped, tag = 'internal scratch']
  %s0 = inlined_call_operand.hbm [shape: f32[16,128], index: 0, kind: input, shape index: {}]
  %s1 = inlined_call_operand.hbm [shape: f32[16,128], index: 1, kind: input, shape index: {}]
  %s2 = inlined_call_operand.hbm [shape: f32[16,128], index: 2, kind: input, shape index: {}]
  %s3 = inlined_call_operand.hbm [shape: f32[1,8,128], index: 3, kind: output, shape index: {0}]
  %s4 = inlined_call_operand.hbm [shape: f32[1,8,128], index: 4, kind: output, shape index: {1}]
  %s5 = inlined_call_operand.hbm [shape: f32[1,8,128], index: 5, kind: output, shape index: {2}]
  %6 = xla_tuple %s3, %s4, %s5
  %s7 = sld [smem:[#allocation0]]
  $region54: #{tpu_custom_call.1} parent=0
    _
  %s9 = ssub.s32 1, %s7
  %s10 = scalar_select 0, %s9, %s7
  $region1: #{tpu_custom_call.1} parent=0
    #allocation2 [shape = 'u8[8192]{0}', space=vmem, size = 0x2000, scoped, tag = 'input window, operand 0, single buffered']
    #allocation3 [shape = 's32[1]{0}', space=sflag, size = 0x4, scoped, tag = 'scoped memory for tpu_custom_call.1']
    #allocation4 [shape = 's32[1]{0}', space=sflag, size = 0x4, scoped, tag = 'scoped memory for tpu_custom_call.1']
    #allocation5 [shape = 'u8[8192]{0}', space=vmem, size = 0x2000, scoped, tag = 'input window, operand 1, single buffered']
    #allocation6 [shape = 's32[1]{0}', space=sflag, size = 0x4, scoped, tag = 'scoped memory for tpu_custom_call.1']
    #allocation7 [shape = 'u8[8192]{0}', space=vmem, size = 0x2000, scoped, tag = 'input window, operand 2, single buffered']
    #allocation8 [shape = 'u8[4096]{0}', space=vmem, size = 0x1000, scoped, tag = 'output window, operand 0, single buffered']
    #allocation9 [shape = 'u8[4096]{0}', space=vmem, size = 0x1000, scoped, tag = 'output window, operand 1, single buffered']
    #allocation10 [shape = 's32[1]{0}', space=sflag, size = 0x4, scoped, tag = 'scoped memory for tpu_custom_call.1']
    #allocation11 [shape = 'u8[4096]{0}', space=vmem, size = 0x1000, scoped, tag = 'output window, operand 2, single buffered']
    %11 = vsyncpa [#allocation3], 0
    %12 = vsyncpa [#allocation6], 0
    %13 = vsyncpa [#allocation4], 0
    %14 = vsyncpa [#allocation10], 0
    // Predicated region
    $region2: #{tpu_custom_call.1} parent=1 // pred_check
      _
    $region3: #{tpu_custom_call.1} parent=1 // pred_check_branch
      %16 = sbr.rel (0) target = $region5
    $region4: #{tpu_custom_call.1} parent=1 // pred_region
      %s17 = sadd.s32 0, 0
      %s18 = smul.u32 2, %s17
      %s20 = ssub.s32 256, 256
      %21 = vsyncadd [#allocation3], %s20
      %s22 = smul.addr %s18, 128
      %s23 = scalar_lea.hbm %s0, %s22
      %s24 = sshll.u32 [#allocation2], 4
      %s25 = int_to_ptr.vmem [resolvable:$true] %s24
      %30 = dma.hbm_to_vmem [thread:$0]  %s23, 256, %s25, [#allocation3], 128, 128, 8
    $region5: #{tpu_custom_call.1} parent=1 // pred_fallthru
      _
    // Predicated region
    $region6: #{tpu_custom_call.1} parent=1 // pred_check
      _
    $region7: #{tpu_custom_call.1} parent=1 // pred_check_branch
      %32 = sbr.rel (0) target = $region9
    $region8: #{tpu_custom_call.1} parent=1 // pred_region
      %s33 = sadd.s32 0, 0
      %s34 = smul.u32 2, %s33
      %s36 = ssub.s32 256, 256
      %37 = vsyncadd [#allocation6], %s36
      %s38 = smul.addr %s34, 128
      %s39 = scalar_lea.hbm %s1, %s38
      %s40 = sshll.u32 [#allocation5], 4
      %s41 = int_to_ptr.vmem [resolvable:$true] %s40
      %46 = dma.hbm_to_vmem [thread:$0]  %s39, 256, %s41, [#allocation6], 128, 128, 8
    $region9: #{tpu_custom_call.1} parent=1 // pred_fallthru
      _
    // Predicated region
    $region10: #{tpu_custom_call.1} parent=1 // pred_check
      _
    $region11: #{tpu_custom_call.1} parent=1 // pred_check_branch
      %48 = sbr.rel (0) target = $region13
    $region12: #{tpu_custom_call.1} parent=1 // pred_region
      %s49 = sadd.s32 0, 0
      %s50 = smul.u32 2, %s49
      %s52 = ssub.s32 256, 256
      %53 = vsyncadd [#allocation6], %s52
      %s54 = smul.addr %s50, 128
      %s55 = scalar_lea.hbm %s2, %s54
      %s56 = sshll.u32 [#allocation7], 4
      %s57 = int_to_ptr.vmem [resolvable:$true] %s56
      %62 = dma.hbm_to_vmem [thread:$0]  %s55, 256, %s57, [#allocation6], 128, 128, 8
    $region13: #{tpu_custom_call.1} parent=1 // pred_fallthru
      _
    // Predicated region
    $region14: #{tpu_custom_call.1} parent=1 // pred_check
      _
    $region15: #{tpu_custom_call.1} parent=1 // pred_check_branch
      %64 = sbr.rel (0) target = $region17
    $region16: #{tpu_custom_call.1} parent=1 // pred_region
      %65 = dma.done [#allocation3], 256
    $region17: #{tpu_custom_call.1} parent=1 // pred_fallthru
      _
    // Predicated region
    $region18: #{tpu_custom_call.1} parent=1 // pred_check
      _
    $region19: #{tpu_custom_call.1} parent=1 // pred_check_branch
      %67 = sbr.rel (0) target = $region21
    $region20: #{tpu_custom_call.1} parent=1 // pred_region
      %68 = dma.done [#allocation6], 256
    $region21: #{tpu_custom_call.1} parent=1 // pred_fallthru
      _
    // Predicated region
    $region22: #{tpu_custom_call.1} parent=1 // pred_check
      _
    $region23: #{tpu_custom_call.1} parent=1 // pred_check_branch
      %70 = sbr.rel (0) target = $region25
    $region24: #{tpu_custom_call.1} parent=1 // pred_region
      %71 = dma.done [#allocation6], 256
    $region25: #{tpu_custom_call.1} parent=1 // pred_fallthru
      _
    %s72 = sadd.s32 0, 0
    %s73 = smul.u32 2, %s72
    %s74 = sadd.s32 0, 0
    %s75 = smul.u32 2, %s74
    %s76 = sadd.s32 0, 0
    %s77 = smul.u32 2, %s76
    %p78 = scmp.eq.s32.totalorder 0, 0
    // Predicated region
    $region26: #{tpu_custom_call.1} parent=1 // pred_check
      %p79 = pneg %p78
    $region27: #{tpu_custom_call.1} parent=1 // pred_check_branch
      %81 = sbr.rel (%p79) target = $region29
    $region28: #{tpu_custom_call.1} parent=1 // pred_region
      %82 = vst [vmem:[#allocation8] sm:$0xff] 0.0
      %83 = vst [vmem:[#allocation9] sm:$0xff] 0.0
      %84 = vst [vmem:[#allocation11] sm:$0xff] 0.0
    $region29: #{tpu_custom_call.1} parent=1 // pred_fallthru
      _
    %v85 = vld [vmem:[#allocation7] sm:$0xff]
    %v86 = vld [vmem:[#allocation7 + $0x8] sm:$0xff]
    %v87 = vld [vmem:[#allocation2] sm:$0xff]
    %v88 = vld [vmem:[#allocation2 + $0x8] sm:$0xff]
    %v89 = vsub.f32 %v87, %v85
    %v90 = vsub.f32 %v88, %v86
    %v91 = vld [vmem:[#allocation5] sm:$0xff]
    %v92 = vld [vmem:[#allocation5 + $0x8] sm:$0xff]
    %v93 = vsub.f32 %v91, %v85
    %v94 = vsub.f32 %v92, %v86
    %v95 = vld [vmem:[#allocation8] sm:$0xff]
    %v96 = vmul.f32 %v89, %v93
    %v97 = vmul.f32 %v90, %v94
    %v98 = vadd.f32 %v96, %v97
    %v99 = vadd.f32 %v95, %v98
    %100 = vst [vmem:[#allocation8] sm:$0xff] %v99
    %v101 = vld [vmem:[#allocation9] sm:$0xff]
    %v102 = vmul.f32 %v89, %v89
    %v103 = vmul.f32 %v90, %v90
    %v104 = vadd.f32 %v102, %v103
    %v105 = vadd.f32 %v101, %v104
    %106 = vst [vmem:[#allocation9] sm:$0xff] %v105
    %v107 = vld [vmem:[#allocation11] sm:$0xff]
    %v108 = vmul.f32 %v93, %v93
    %v109 = vmul.f32 %v94, %v94
    %v110 = vadd.f32 %v108, %v109
    %v111 = vadd.f32 %v107, %v110
    %112 = vst [vmem:[#allocation11] sm:$0xff] %v111
    // Predicated region
    $region30: #{tpu_custom_call.1} parent=1 // pred_check
      _
    $region31: #{tpu_custom_call.1} parent=1 // pred_check_branch
      %114 = sbr.rel (0) target = $region33
    $region32: #{tpu_custom_call.1} parent=1 // pred_region
      %s116 = ssub.s32 128, 128
      %117 = vsyncadd [#allocation4], %s116
      %s119 = sshll.u32 [#allocation8], 4
      %s120 = int_to_ptr.vmem [resolvable:$true] %s119
      %122 = dma.vmem_to_hbm [thread:$0]  %s120, 128, %s3, [#allocation4]
    $region33: #{tpu_custom_call.1} parent=1 // pred_fallthru
      _
    // Predicated region
    $region34: #{tpu_custom_call.1} parent=1 // pred_check
      _
    $region35: #{tpu_custom_call.1} parent=1 // pred_check_branch
      %124 = sbr.rel (0) target = $region37
    $region36: #{tpu_custom_call.1} parent=1 // pred_region
      %s126 = ssub.s32 128, 128
      %127 = vsyncadd [#allocation10], %s126
      %s129 = sshll.u32 [#allocation9], 4
      %s130 = int_to_ptr.vmem [resolvable:$true] %s129
      %132 = dma.vmem_to_hbm [thread:$0]  %s130, 128, %s4, [#allocation10]
    $region37: #{tpu_custom_call.1} parent=1 // pred_fallthru
      _
    // Predicated region
    $region38: #{tpu_custom_call.1} parent=1 // pred_check
      _
    $region39: #{tpu_custom_call.1} parent=1 // pred_check_branch
      %134 = sbr.rel (0) target = $region41
    $region40: #{tpu_custom_call.1} parent=1 // pred_region
      %s136 = ssub.s32 128, 128
      %137 = vsyncadd [#allocation10], %s136
      %s139 = sshll.u32 [#allocation11], 4
      %s140 = int_to_ptr.vmem [resolvable:$true] %s139
      %142 = dma.vmem_to_hbm [thread:$0]  %s140, 128, %s5, [#allocation10]
    $region41: #{tpu_custom_call.1} parent=1 // pred_fallthru
      _
    // Predicated region
    $region42: #{tpu_custom_call.1} parent=1 // pred_check
      _
    $region43: #{tpu_custom_call.1} parent=1 // pred_check_branch
      %144 = sbr.rel (0) target = $region45
    $region44: #{tpu_custom_call.1} parent=1 // pred_region
      %145 = dma.done [#allocation4], 128
    $region45: #{tpu_custom_call.1} parent=1 // pred_fallthru
      _
    // Predicated region
    $region46: #{tpu_custom_call.1} parent=1 // pred_check
      _
    $region47: #{tpu_custom_call.1} parent=1 // pred_check_branch
      %147 = sbr.rel (0) target = $region49
    $region48: #{tpu_custom_call.1} parent=1 // pred_region
      %148 = dma.done [#allocation10], 128
    $region49: #{tpu_custom_call.1} parent=1 // pred_fallthru
      _
    // Predicated region
    $region50: #{tpu_custom_call.1} parent=1 // pred_check
      _
    $region51: #{tpu_custom_call.1} parent=1 // pred_check_branch
      %150 = sbr.rel (0) target = $region53
    $region52: #{tpu_custom_call.1} parent=1 // pred_region
      %151 = dma.done [#allocation10], 128
    $region53: #{tpu_custom_call.1} parent=1 // pred_fallthru
      _
    %152 = vsyncpa [#allocation3], 1
    %153 = vsyncpa [#allocation6], 1
    %154 = vsyncpa [#allocation4], 1
    %155 = vsyncpa [#allocation10], 1

</llo_original>
